<compile_context>
chip_gen: v6e
topology: v6e:2x2x1
jax: 0.10.0
libtpu: 0.0.40
codegen_flags: <defaults>
</compile_context>

<pallas_src>
import functools

import jax
import jax.numpy as jnp
from jax import lax
from jax.experimental import pallas as pl
from jax.experimental.pallas import tpu as pltpu


# ----------------------------------------------------------------------------
# Kernel helpers
# ----------------------------------------------------------------------------

def _normalize_latents(x_f32, w_lat):
    # EmbedToLatents: y = x @ W^T (bias-free nn.Linear, weight kept in PyTorch
    # (out, in) layout -> contracted in-kernel, no wrapper transpose), then
    # F.normalize(dim=-1): y / max(||y||, 1e-12) == y * rsqrt(max(||y||^2, 1e-24)).
    y = lax.dot_general(x_f32.astype(w_lat.dtype), w_lat,
                        (((1,), (1,)), ((), ())),
                        preferred_element_type=jnp.float32)              # (1, L)
    ssq = jnp.sum(y * y, axis=-1, keepdims=True)
    return y * lax.rsqrt(jnp.maximum(ssq, 1e-24))


def _image_embed(img_ref, wvis_ref, patch_ref, wpatch_ref):
    # --- stand-in VisualExtractor fc_feats: GAP over HW (lane reduce) + tiny
    #     C->D projection as VPU broadcast-mul + sublane reduce (no MXU). -----
    img = img_ref[0].astype(jnp.float32)                                 # (C, HW)
    img_mean = jnp.mean(img, axis=-1, keepdims=True)                     # (C, 1)
    wvis = wvis_ref[...].astype(jnp.float32)                             # (C, D)
    fc_feats = jnp.sum(img_mean * wvis, axis=0, keepdims=True)           # (1, D)

    # --- stand-in ViT Extractor: mean over patches hoisted through the linear
    #     patch embed -> one (1, pd) @ (pd, D) matmul instead of P of them. ---
    patch_mean = jnp.mean(patch_ref[0].astype(jnp.float32), axis=0,
                          keepdims=True)                                  # (1, pd)
    tokens = jnp.dot(patch_mean.astype(wpatch_ref.dtype), wpatch_ref[...],
                     preferred_element_type=jnp.float32)                  # (1, D)
    return tokens + fc_feats                                              # (1, D)


# ----------------------------------------------------------------------------
# Pallas kernels (one grid step == one batch element)
# ----------------------------------------------------------------------------

def _r2gen_train_kernel(img_ref, wvis_ref, patch_ref, wpatch_ref,
                        texthid_ref, wout_ref, wtxt_ref, wimg_ref,
                        lat_ref, logits_ref):
    image_embeds = _image_embed(img_ref, wvis_ref, patch_ref, wpatch_ref)  # (1, D)

    # --- stand-in EncoderDecoder (mode='forward') ----------------------------
    th = texthid_ref[0]                                                    # (T, D) bf16
    text_embeds = jnp.mean(th.astype(jnp.float32), axis=0, keepdims=True)  # (1, D)
    logits_ref[0] = jnp.dot(th, wout_ref[...],
                            preferred_element_type=jnp.float32)            # (T, V)

    # --- EmbedToLatents x2 (exact), packed into one lane-dense (1, 2L) store -
    tlat = _normalize_latents(text_embeds, wtxt_ref[...])                  # (1, L)
    ilat = _normalize_latents(image_embeds, wimg_ref[...])                 # (1, L)
    lat_ref[0] = jnp.concatenate([tlat, ilat], axis=-1)                    # (1, 2L)


def _r2gen_sample_kernel(img_ref, wvis_ref, patch_ref, wpatch_ref, wout_ref,
                         logits_ref):
    image_embeds = _image_embed(img_ref, wvis_ref, patch_ref, wpatch_ref)  # (1, D)
    logits_ref[0] = jnp.dot(image_embeds.astype(wout_ref.dtype), wout_ref[...],
                            preferred_element_type=jnp.float32)            # (1, V)


_COMPILER_PARAMS = pltpu.CompilerParams(
    dimension_semantics=("parallel",),        # batch axis shards across v7x's 2 TCs
    vmem_limit_bytes=32 * 1024 * 1024,
)


# ----------------------------------------------------------------------------
# pallas_call wrappers
# ----------------------------------------------------------------------------

def _bf16(*arrays):
    return tuple(a.astype(jnp.bfloat16) for a in arrays)


def fused_r2gen_train(img3d, w_vis, patches, w_patch, text_hidden,
                      w_out, w_txt_lat, w_img_lat):
    B, C, HW = img3d.shape
    _, P, pd = patches.shape
    D = w_patch.shape[1]
    T = text_hidden.shape[1]
    V = w_out.shape[1]
    L = w_txt_lat.shape[0]

    # bf16 at the kernel boundary; all dots accumulate in f32.
    (img3d, w_vis, patches, w_patch, text_hidden,
     w_out, w_txt_lat, w_img_lat) = _bf16(
        img3d, w_vis, patches, w_patch, text_hidden, w_out, w_txt_lat, w_img_lat)

    flops = 2 * B * (pd * D + T * D * V + 2 * D * L) + B * (C * HW + P * pd + C * D)
    bytes_in = 2 * (img3d.size + w_vis.size + patches.size + w_patch.size
                    + text_hidden.size + w_out.size + w_txt_lat.size + w_img_lat.size)
    bytes_out = 4 * (B * 2 * L + B * T * V)
    cost = pl.CostEstimate(flops=flops, transcendentals=2 * B,
                           bytes_accessed=bytes_in + bytes_out)

    lat, logits = pl.pallas_call(
        _r2gen_train_kernel,
        grid=(B,),
        in_specs=[
            pl.BlockSpec((1, C, HW), lambda b: (b, 0, 0)),
            pl.BlockSpec((C, D), lambda b: (0, 0)),
            pl.BlockSpec((1, P, pd), lambda b: (b, 0, 0)),
            pl.BlockSpec((pd, D), lambda b: (0, 0)),
            pl.BlockSpec((1, T, D), lambda b: (b, 0, 0)),
            pl.BlockSpec((D, V), lambda b: (0, 0)),
            pl.BlockSpec((L, D), lambda b: (0, 0)),
            pl.BlockSpec((L, D), lambda b: (0, 0)),
        ],
        out_specs=(
            pl.BlockSpec((1, 1, 2 * L), lambda b: (b, 0, 0)),
            pl.BlockSpec((1, T, V), lambda b: (b, 0, 0)),
        ),
        out_shape=(
            jax.ShapeDtypeStruct((B, 1, 2 * L), jnp.float32),
            jax.ShapeDtypeStruct((B, T, V), jnp.float32),
        ),
        compiler_params=_COMPILER_PARAMS,
        cost_estimate=cost,
    )(img3d, w_vis, patches, w_patch, text_hidden, w_out, w_txt_lat, w_img_lat)

    lat = lat.reshape(B, 2 * L)
    return lat[:, :L], lat[:, L:], logits


def fused_r2gen_sample(img3d, w_vis, patches, w_patch, w_out):
    B, C, HW = img3d.shape
    _, P, pd = patches.shape
    D = w_patch.shape[1]
    V = w_out.shape[1]

    img3d, w_vis, patches, w_patch, w_out = _bf16(
        img3d, w_vis, patches, w_patch, w_out)

    flops = 2 * B * (pd * D + D * V) + B * (C * HW + P * pd + C * D)
    bytes_in = 2 * (img3d.size + w_vis.size + patches.size + w_patch.size + w_out.size)
    bytes_out = 4 * B * V
    cost = pl.CostEstimate(flops=flops, transcendentals=0,
                           bytes_accessed=bytes_in + bytes_out)

    logits = pl.pallas_call(
        _r2gen_sample_kernel,
        grid=(B,),
        in_specs=[
            pl.BlockSpec((1, C, HW), lambda b: (b, 0, 0)),
            pl.BlockSpec((C, D), lambda b: (0, 0)),
            pl.BlockSpec((1, P, pd), lambda b: (b, 0, 0)),
            pl.BlockSpec((pd, D), lambda b: (0, 0)),
            pl.BlockSpec((D, V), lambda b: (0, 0)),
        ],
        out_specs=pl.BlockSpec((1, 1, V), lambda b: (b, 0, 0)),
        out_shape=jax.ShapeDtypeStruct((B, 1, V), jnp.float32),
        compiler_params=_COMPILER_PARAMS,
        cost_estimate=cost,
    )(img3d, w_vis, patches, w_patch, w_out)

    return logits.reshape(B, V)


# ----------------------------------------------------------------------------
# Model pieces (stand-ins for external submodules + exact glue logic)
# ----------------------------------------------------------------------------

def exists(val):
    return val is not None


def default(val, d):
    return val if exists(val) else d


def extract_patches(images_nchw, patch):
    # ViT-style patchify (JAX glue): NCHW -> (B, num_patches, C*patch*patch).
    # With C=4, patch=8 the patch dim is 256 (lane-aligned multiple of 128).
    # TODO(synk): could be folded into a BlockSpec index_map to avoid the
    # XLA-side transpose copy at production image sizes.
    B, C, H, W = images_nchw.shape
    x = images_nchw.reshape(B, C, H // patch, patch, W // patch, patch)
    x = jnp.transpose(x, (0, 2, 4, 1, 3, 5))
    return x.reshape(B, (H // patch) * (W // patch), C * patch * patch)


def init_params(key, *, C, dim, dim_latents, patch, vocab):
    ks = jax.random.split(key, 6)
    patch_dim = C * patch * patch
    scale = 0.02
    return {
        # stand-in VisualExtractor projection (GAP done in-kernel, no folding).
        "w_visual": scale * jax.random.normal(ks[0], (C, dim), jnp.float32),
        # stand-in vit Extractor patch embedding
        "w_patch": scale * jax.random.normal(ks[1], (patch_dim, dim), jnp.float32),
        # stand-in EncoderDecoder: token embedding + output head
        "tok_embed": scale * jax.random.normal(ks[2], (vocab, dim), jnp.float32),
        "w_out": scale * jax.random.normal(ks[3], (dim, vocab), jnp.float32),
        # EmbedToLatents weights, PyTorch nn.Linear layout (out, in)
        "w_img_to_latents": scale * jax.random.normal(ks[4], (dim_latents, dim), jnp.float32),
        "w_text_to_latents": scale * jax.random.normal(ks[5], (dim_latents, dim), jnp.float32),
    }


def r2gen_forward(params, images, text=None, *, patch, mode="train"):
    B, C, H, W = images.shape

    # _, fc_feats = self.visual_extractor(images)
    # TODO(synk): real VisualExtractor is a ResNet backbone; GAP+linear stand-in
    # (GAP + tiny C->D projection computed inside the fused kernel).
    img3d = images.reshape(B, C, H * W)

    # image_tokens = self.img_encoder(images)
    # TODO(synk): real img_encoder is a ViT Extractor; patchify+linear+mean stand-in.
    assert exists(images)
    patches = extract_patches(images, patch)                              # (B, P, pd)

    if mode == "train":
        # TODO(synk): real EncoderDecoder is the R2Gen transformer; stand-in:
        # token-embedding gather stays in JAX (bf16), all dense math in kernel.
        text_hidden = jnp.take(params["tok_embed"].astype(jnp.bfloat16), text, axis=0)
        text_latents, image_latents, output = fused_r2gen_train(
            img3d, params["w_visual"], patches, params["w_patch"],
            text_hidden, params["w_out"],
            params["w_text_to_latents"], params["w_img_to_latents"])
        return text_latents, image_latents, output
    elif mode == "sample":
        # TODO(synk): beam/greedy sampling of the real EncoderDecoder not modeled.
        logits = fused_r2gen_sample(img3d, params["w_visual"], patches,
                                    params["w_patch"], params["w_out"])
        return jnp.argmax(logits, axis=-1)
    else:
        raise ValueError


# ----------------------------------------------------------------------------
# Main
# ----------------------------------------------------------------------------

if __name__ == "__main__":
    # Lane-dense small shapes: dim/dim_latents = 128, vocab = 256,
    # patch_dim = C*patch*patch = 256.
    B, C, H, W = 2, 4, 16, 16
    dim = 128
    dim_latents = default(None, dim)   # args.dim_latents = None -> defaults to dim
    patch = 8
    T = 8
    vocab = 256

    key = jax.random.PRNGKey(0)
    k_img, k_txt, k_par = jax.random.split(key, 3)

    images = jax.random.normal(k_img, (B, C, H, W), jnp.float32)   # NCHW like PyTorch
    text = jax.random.randint(k_txt, (B, T), 0, vocab, jnp.int32)

    params = init_params(k_par, C=C, dim=dim, dim_latents=dim_latents,
                         patch=patch, vocab=vocab)

    fwd_train = jax.jit(functools.partial(r2gen_forward, patch=patch, mode="train"))
    text_latents, image_latents, output = fwd_train(params, images, text)
    jax.block_until_ready((text_latents, image_latents, output))

    assert text_latents.shape == (B, dim_latents)
    assert image_latents.shape == (B, dim_latents)
    assert output.shape == (B, T, vocab)
    # latents are L2-normalized along the last dim (F.normalize semantics)
    assert jnp.allclose(jnp.linalg.norm(text_latents, axis=-1), 1.0, atol=1e-4)
    assert jnp.allclose(jnp.linalg.norm(image_latents, axis=-1), 1.0, atol=1e-4)

    fwd_sample = jax.jit(functools.partial(r2gen_forward, patch=patch, mode="sample"))
    sample_ids = fwd_sample(params, images)
    jax.block_until_ready(sample_ids)
    assert sample_ids.shape == (B,)

    print("KERNEL_OK")
</pallas_src>

<mosaic_0001>
module attributes {stable_mosaic.version = 11 : i64} {
  func.func @_r2gen_train_kernel(%arg0: i32, %arg1: memref<1x4x256xbf16, #tpu.memory_space<vmem>>, %arg2: memref<4x128xbf16, #tpu.memory_space<vmem>>, %arg3: memref<1x4x256xbf16, #tpu.memory_space<vmem>>, %arg4: memref<256x128xbf16, #tpu.memory_space<vmem>>, %arg5: memref<1x8x128xbf16, #tpu.memory_space<vmem>>, %arg6: memref<128x256xbf16, #tpu.memory_space<vmem>>, %arg7: memref<128x128xbf16, #tpu.memory_space<vmem>>, %arg8: memref<128x128xbf16, #tpu.memory_space<vmem>>, %arg9: memref<1x1x256xf32, #tpu.memory_space<vmem>>, %arg10: memref<1x8x256xf32, #tpu.memory_space<vmem>>) attributes {dimension_semantics = [#tpu.dimension_semantics<parallel>], iteration_bounds = array<i64: 2>, scalar_prefetch = 0 : i64, scratch_operands = 0 : i64, tpu.core_type = #tpu.core_type<tc>, window_params = [{transform_indices = @transform_0, window_bounds = array<i64: 1, 4, 256>}, {pipeline_mode = #tpu.pipeline_mode<synchronous>, transform_indices = @transform_1, window_bounds = array<i64: 4, 128>}, {transform_indices = @transform_2, window_bounds = array<i64: 1, 4, 256>}, {pipeline_mode = #tpu.pipeline_mode<synchronous>, transform_indices = @transform_3, window_bounds = array<i64: 256, 128>}, {transform_indices = @transform_4, window_bounds = array<i64: 1, 8, 128>}, {pipeline_mode = #tpu.pipeline_mode<synchronous>, transform_indices = @transform_5, window_bounds = array<i64: 128, 256>}, {pipeline_mode = #tpu.pipeline_mode<synchronous>, transform_indices = @transform_6, window_bounds = array<i64: 128, 128>}, {pipeline_mode = #tpu.pipeline_mode<synchronous>, transform_indices = @transform_7, window_bounds = array<i64: 128, 128>}, {transform_indices = @transform_8, window_bounds = array<i64: 1, 1, 256>}, {transform_indices = @transform_9, window_bounds = array<i64: 1, 8, 256>}]} {
    %c0 = arith.constant 0 : index
    %c0_0 = arith.constant 0 : index
    %c0_1 = arith.constant 0 : index
    %0 = vector.load %arg1[%c0, %c0_0, %c0_1] : memref<1x4x256xbf16, #tpu.memory_space<vmem>>, vector<1x4x256xbf16>
    %1 = vector.shape_cast %0 : vector<1x4x256xbf16> to vector<4x256xbf16>
    %2 = arith.extf %1 : vector<4x256xbf16> to vector<4x256xf32>
    %cst = arith.constant dense<0.000000e+00> : vector<4xf32>
    %3 = vector.multi_reduction <add>, %2, %cst [1] : vector<4x256xf32> to vector<4xf32>
    %4 = vector.shape_cast %3 : vector<4xf32> to vector<4x1xf32>
    %cst_2 = arith.constant 2.560000e+02 : f32
    %5 = vector.broadcast %cst_2 : f32 to vector<4x1xf32>
    %6 = arith.divf %4, %5 : vector<4x1xf32>
    %c0_3 = arith.constant 0 : index
    %c0_4 = arith.constant 0 : index
    %7 = vector.load %arg2[%c0_3, %c0_4] : memref<4x128xbf16, #tpu.memory_space<vmem>>, vector<4x128xbf16>
    %8 = arith.extf %7 : vector<4x128xbf16> to vector<4x128xf32>
    %9 = vector.broadcast %6 : vector<4x1xf32> to vector<4x128xf32>
    %10 = arith.mulf %9, %8 : vector<4x128xf32>
    %cst_5 = arith.constant dense<0.000000e+00> : vector<128xf32>
    %11 = vector.multi_reduction <add>, %10, %cst_5 [0] : vector<4x128xf32> to vector<128xf32>
    %12 = vector.shape_cast %11 : vector<128xf32> to vector<1x128xf32>
    %c0_6 = arith.constant 0 : index
    %c0_7 = arith.constant 0 : index
    %c0_8 = arith.constant 0 : index
    %13 = vector.load %arg3[%c0_6, %c0_7, %c0_8] : memref<1x4x256xbf16, #tpu.memory_space<vmem>>, vector<1x4x256xbf16>
    %14 = vector.shape_cast %13 : vector<1x4x256xbf16> to vector<4x256xbf16>
    %15 = arith.extf %14 : vector<4x256xbf16> to vector<4x256xf32>
    %cst_9 = arith.constant dense<0.000000e+00> : vector<256xf32>
    %16 = vector.multi_reduction <add>, %15, %cst_9 [0] : vector<4x256xf32> to vector<256xf32>
    %17 = vector.shape_cast %16 : vector<256xf32> to vector<1x256xf32>
    %cst_10 = arith.constant 4.000000e+00 : f32
    %18 = vector.broadcast %cst_10 : f32 to vector<1x256xf32>
    %19 = arith.divf %17, %18 : vector<1x256xf32>
    %20 = arith.truncf %19 : vector<1x256xf32> to vector<1x256xbf16>
    %c0_11 = arith.constant 0 : index
    %c0_12 = arith.constant 0 : index
    %21 = vector.load %arg4[%c0_11, %c0_12] : memref<256x128xbf16, #tpu.memory_space<vmem>>, vector<256x128xbf16>
    %cst_13 = arith.constant dense<0.000000e+00> : vector<1x128xf32>
    %22 = tpu.matmul %20, %21, %cst_13 {dimension_numbers = #tpu.dot_dimension_numbers<[1], [0], [0], [1], [0, 0, 1, 1], [], []>} : vector<1x256xbf16>, vector<256x128xbf16>, vector<1x128xf32> -> vector<1x128xf32>
    %23 = arith.addf %22, %12 : vector<1x128xf32>
    %c0_14 = arith.constant 0 : index
    %c0_15 = arith.constant 0 : index
    %c0_16 = arith.constant 0 : index
    %24 = vector.load %arg5[%c0_14, %c0_15, %c0_16] : memref<1x8x128xbf16, #tpu.memory_space<vmem>>, vector<1x8x128xbf16>
    %25 = vector.shape_cast %24 : vector<1x8x128xbf16> to vector<8x128xbf16>
    %26 = arith.extf %25 : vector<8x128xbf16> to vector<8x128xf32>
    %cst_17 = arith.constant dense<0.000000e+00> : vector<128xf32>
    %27 = vector.multi_reduction <add>, %26, %cst_17 [0] : vector<8x128xf32> to vector<128xf32>
    %28 = vector.shape_cast %27 : vector<128xf32> to vector<1x128xf32>
    %cst_18 = arith.constant 8.000000e+00 : f32
    %29 = vector.broadcast %cst_18 : f32 to vector<1x128xf32>
    %30 = arith.divf %28, %29 : vector<1x128xf32>
    %c0_19 = arith.constant 0 : index
    %c0_20 = arith.constant 0 : index
    %31 = vector.load %arg6[%c0_19, %c0_20] : memref<128x256xbf16, #tpu.memory_space<vmem>>, vector<128x256xbf16>
    %cst_21 = arith.constant dense<0.000000e+00> : vector<8x256xf32>
    %32 = tpu.matmul %25, %31, %cst_21 {dimension_numbers = #tpu.dot_dimension_numbers<[1], [0], [0], [1], [0, 0, 1, 1], [], []>} : vector<8x128xbf16>, vector<128x256xbf16>, vector<8x256xf32> -> vector<8x256xf32>
    %c0_22 = arith.constant 0 : index
    %c0_23 = arith.constant 0 : index
    %c0_24 = arith.constant 0 : index
    %33 = vector.load %arg10[%c0_22, %c0_23, %c0_24] : memref<1x8x256xf32, #tpu.memory_space<vmem>>, vector<1x8x256xf32>
    %34 = vector.shape_cast %33 : vector<1x8x256xf32> to vector<8x256xf32>
    %35 = vector.shape_cast %32 : vector<8x256xf32> to vector<1x8x256xf32>
    tpu.vector_store %arg10[%c0_22, %c0_23, %c0_24], %35 {strides = array<i32>} : memref<1x8x256xf32, #tpu.memory_space<vmem>>, vector<1x8x256xf32>,
    %c0_25 = arith.constant 0 : index
    %c0_26 = arith.constant 0 : index
    %36 = vector.load %arg7[%c0_25, %c0_26] : memref<128x128xbf16, #tpu.memory_space<vmem>>, vector<128x128xbf16>
    %37 = arith.truncf %30 : vector<1x128xf32> to vector<1x128xbf16>
    %cst_27 = arith.constant dense<0.000000e+00> : vector<1x128xf32>
    %38 = tpu.matmul %37, %36, %cst_27 {dimension_numbers = #tpu.dot_dimension_numbers<[1], [1], [0], [0], [0, 0, 1, 0], [], []>} : vector<1x128xbf16>, vector<128x128xbf16>, vector<1x128xf32> -> vector<1x128xf32>
    %39 = arith.mulf %38, %38 : vector<1x128xf32>
    %cst_28 = arith.constant dense<0.000000e+00> : vector<1xf32>
    %40 = vector.multi_reduction <add>, %39, %cst_28 [1] : vector<1x128xf32> to vector<1xf32>
    %41 = vector.shape_cast %40 : vector<1xf32> to vector<1x1xf32>
    %cst_29 = arith.constant 1.000000e-24 : f32
    %42 = vector.broadcast %cst_29 : f32 to vector<1x1xf32>
    %43 = arith.maximumf %41, %42 : vector<1x1xf32>
    %44 = math.rsqrt %43 : vector<1x1xf32>
    %45 = vector.broadcast %44 : vector<1x1xf32> to vector<1x128xf32>
    %46 = arith.mulf %38, %45 : vector<1x128xf32>
    %c0_30 = arith.constant 0 : index
    %c0_31 = arith.constant 0 : index
    %47 = vector.load %arg8[%c0_30, %c0_31] : memref<128x128xbf16, #tpu.memory_space<vmem>>, vector<128x128xbf16>
    %48 = arith.truncf %23 : vector<1x128xf32> to vector<1x128xbf16>
    %cst_32 = arith.constant dense<0.000000e+00> : vector<1x128xf32>
    %49 = tpu.matmul %48, %47, %cst_32 {dimension_numbers = #tpu.dot_dimension_numbers<[1], [1], [0], [0], [0, 0, 1, 0], [], []>} : vector<1x128xbf16>, vector<128x128xbf16>, vector<1x128xf32> -> vector<1x128xf32>
    %50 = arith.mulf %49, %49 : vector<1x128xf32>
    %cst_33 = arith.constant dense<0.000000e+00> : vector<1xf32>
    %51 = vector.multi_reduction <add>, %50, %cst_33 [1] : vector<1x128xf32> to vector<1xf32>
    %52 = vector.shape_cast %51 : vector<1xf32> to vector<1x1xf32>
    %cst_34 = arith.constant 1.000000e-24 : f32
    %53 = vector.broadcast %cst_34 : f32 to vector<1x1xf32>
    %54 = arith.maximumf %52, %53 : vector<1x1xf32>
    %55 = math.rsqrt %54 : vector<1x1xf32>
    %56 = vector.broadcast %55 : vector<1x1xf32> to vector<1x128xf32>
    %57 = arith.mulf %49, %56 : vector<1x128xf32>
    %58 = tpu.concatenate %46, %57 in 1 : vector<1x128xf32>, vector<1x128xf32> -> vector<1x256xf32>
    %c0_35 = arith.constant 0 : index
    %c0_36 = arith.constant 0 : index
    %c0_37 = arith.constant 0 : index
    %59 = vector.load %arg9[%c0_35, %c0_36, %c0_37] : memref<1x1x256xf32, #tpu.memory_space<vmem>>, vector<1x1x256xf32>
    %60 = vector.shape_cast %59 : vector<1x1x256xf32> to vector<1x256xf32>
    %61 = vector.shape_cast %58 : vector<1x256xf32> to vector<1x1x256xf32>
    tpu.vector_store %arg9[%c0_35, %c0_36, %c0_37], %61 {strides = array<i32>} : memref<1x1x256xf32, #tpu.memory_space<vmem>>, vector<1x1x256xf32>,
    return
  }
  func.func @transform_0(%arg0: i32) -> (i32, i32, i32) {
    %c0_i32 = arith.constant 0 : i32
    %c0_i32_0 = arith.constant 0 : i32
    %c0_i32_1 = arith.constant 0 : i32
    return %arg0, %c0_i32, %c0_i32_0 : i32, i32, i32
  }
  func.func @transform_1(%arg0: i32) -> (i32, i32) {
    %c0_i32 = arith.constant 0 : i32
    %c0_i32_0 = arith.constant 0 : i32
    %c0_i32_1 = arith.constant 0 : i32
    return %c0_i32, %c0_i32_0 : i32, i32
  }
  func.func @transform_2(%arg0: i32) -> (i32, i32, i32) {
    %c0_i32 = arith.constant 0 : i32
    %c0_i32_0 = arith.constant 0 : i32
    %c0_i32_1 = arith.constant 0 : i32
    return %arg0, %c0_i32, %c0_i32_0 : i32, i32, i32
  }
  func.func @transform_3(%arg0: i32) -> (i32, i32) {
    %c0_i32 = arith.constant 0 : i32
    %c0_i32_0 = arith.constant 0 : i32
    %c0_i32_1 = arith.constant 0 : i32
    return %c0_i32, %c0_i32_0 : i32, i32
  }
  func.func @transform_4(%arg0: i32) -> (i32, i32, i32) {
    %c0_i32 = arith.constant 0 : i32
    %c0_i32_0 = arith.constant 0 : i32
    %c0_i32_1 = arith.constant 0 : i32
    return %arg0, %c0_i32, %c0_i32_0 : i32, i32, i32
  }
  func.func @transform_5(%arg0: i32) -> (i32, i32) {
    %c0_i32 = arith.constant 0 : i32
    %c0_i32_0 = arith.constant 0 : i32
    %c0_i32_1 = arith.constant 0 : i32
    return %c0_i32, %c0_i32_0 : i32, i32
  }
  func.func @transform_6(%arg0: i32) -> (i32, i32) {
    %c0_i32 = arith.constant 0 : i32
    %c0_i32_0 = arith.constant 0 : i32
    %c0_i32_1 = arith.constant 0 : i32
    return %c0_i32, %c0_i32_0 : i32, i32
  }
  func.func @transform_7(%arg0: i32) -> (i32, i32) {
    %c0_i32 = arith.constant 0 : i32
    %c0_i32_0 = arith.constant 0 : i32
    %c0_i32_1 = arith.constant 0 : i32
    return %c0_i32, %c0_i32_0 : i32, i32
  }
  func.func @transform_8(%arg0: i32) -> (i32, i32, i32) {
    %c0_i32 = arith.constant 0 : i32
    %c0_i32_0 = arith.constant 0 : i32
    %c0_i32_1 = arith.constant 0 : i32
    return %arg0, %c0_i32, %c0_i32_0 : i32, i32, i32
  }
  func.func @transform_9(%arg0: i32) -> (i32, i32, i32) {
    %c0_i32 = arith.constant 0 : i32
    %c0_i32_0 = arith.constant 0 : i32
    %c0_i32_1 = arith.constant 0 : i32
    return %arg0, %c0_i32, %c0_i32_0 : i32, i32, i32
  }
}

</mosaic_0001>

<llo_original>
// kernel: r2gen_forward.1
$region0: #{r2gen_forward.1}
  #allocation0 [shape = 'u32[]', space=smem, size = 0x4, offset = 0x4, fixed_abs, tag = 'smem constant byte address 0x4 - core index']
  #allocation1 [shape = 'u32[144,128]{1,0:T(1,128)}', space=vmem, size = 0x12000, scoped, tag = 'internal scratch']
  %s0 = inlined_call_operand.vmem [shape: bf16[2,4,256], index: 0, kind: input, shape index: {}]
  %s1 = inlined_call_operand.vmem [shape: bf16[4,128], index: 1, kind: input, shape index: {}]
  %s2 = inlined_call_operand.vmem [shape: bf16[2,4,256], index: 2, kind: input, shape index: {}]
  %s3 = inlined_call_operand.vmem [shape: bf16[256,128], index: 3, kind: input, shape index: {}]
  %s4 = inlined_call_operand.vmem [shape: bf16[2,8,128], index: 4, kind: input, shape index: {}]
  %s5 = inlined_call_operand.vmem [shape: bf16[128,256], index: 5, kind: input, shape index: {}]
  %s6 = inlined_call_operand.vmem [shape: bf16[128,128], index: 6, kind: input, shape index: {}]
  %s7 = inlined_call_operand.vmem [shape: bf16[128,128], index: 7, kind: input, shape index: {}]
  %s8 = inlined_call_operand.vmem [shape: f32[2,1,256], index: 8, kind: output, shape index: {0}]
  %s9 = inlined_call_operand.hbm [shape: f32[2,8,256], index: 9, kind: output, shape index: {1}]
  %10 = xla_tuple %s8, %s9
  %s11 = sld [smem:[#allocation0]]
  $region73: #{r2gen_forward.1} parent=0
    _
  %s13 = ssub.s32 1, %s11
  %s14 = scalar_select 0, %s13, %s11
  $region1: #{r2gen_forward.1} parent=0
    #allocation2 [shape = 'u8[16384]{0}', space=vmem, size = 0x4000, scoped, tag = 'output window, operand 1']
    #allocation3 [shape = 's32[2]{0}', space=sflag, size = 0x8, scoped, tag = 'scoped memory for r2gen_forward.1']
    %15 = vsyncpa [#allocation3], 0
    %s16 = scalar_lea.sflag [#allocation3], 1
    %17 = vsyncpa %s16, 0
    loop: start=0, step=1, limit=4
    $region2: #{r2gen_forward.1} parent=1 // loop_pre_header
      _
    $region3: #{r2gen_forward.1} parent=1 // loop_header
      %s19 = sphi 0, %s23
      %p20 = scmp.ge.s32.totalorder %s19, 4
      %s29 = sphi 0, %s31
      %s32 = sphi 0, %s29
      %s33 = sphi 0, %s32
      %s49 = sphi 0, %s33
      %s53 = sphi 0, %s53
      %s55 = sphi 0, %s53
      %s56 = sphi 0, %s55
      %s70 = sphi 0, %s56
      %s76 = sphi 0, %s78
      %s79 = sphi 0, %s76
      %s80 = sphi 0, %s79
      %s96 = sphi 0, %s80
      %s100 = sphi 0, %s100
      %s102 = sphi 0, %s100
      %s103 = sphi 0, %s102
      %s117 = sphi 0, %s103
      %s123 = sphi 0, %s125
      %s126 = sphi 0, %s123
      %s127 = sphi 0, %s126
      %s143 = sphi 0, %s127
      %s147 = sphi 0, %s147
      %s149 = sphi 0, %s147
      %s150 = sphi 0, %s149
      %s164 = sphi 0, %s150
      %s168 = sphi 0, %s168
      %s170 = sphi 0, %s168
      %s171 = sphi 0, %s170
      %s185 = sphi 0, %s171
      %s189 = sphi 0, %s189
      %s191 = sphi 0, %s189
      %s192 = sphi 0, %s191
      %s206 = sphi 0, %s192
      %s212 = sphi 0, %s214
      %s215 = sphi 0, %s212
      %s216 = sphi 0, %s215
      %s232 = sphi 0, %s216
      %s238 = sphi 0, %s240
      %s241 = sphi 0, %s238
      %s242 = sphi 0, %s241
      %s258 = sphi 0, %s242
    $region4: #{r2gen_forward.1} parent=1 // loop_header_branch
      %22 = sbr.rel (%p20) target = $region8
    $region5: #{r2gen_forward.1} parent=1 // loop_body
      %s24 = ssub.s32 %s19, 1
      %s25 = ssub.s32 %s19, 2
      %s26 = sadd.s32 %s19, 1
      %s27 = ssub.s32 %s19, %s26
      %p28 = scmp.eq.s32.totalorder %s27, 0
      %s30 = sadd.s32 %s29, 1
      %s31 = scalar_select %p28, %s29, %s30
      %p34 = pneg %p28
      %p35 = scmp.eq.s32.totalorder %s19, 1
      %p36 = por %p34, %p35
      %p37 = scmp.ne.s32.totalorder %s29, %s32
      %p38 = scmp.eq.s32.totalorder %s19, 0
      %p39 = por %p37, %p38
      %p40 = scmp.ne.s32.totalorder %s29, %s32
      %p41 = scmp.eq.s32.totalorder %s24, 1
      %p42 = por %p40, %p41
      %p43 = scmp.ne.s32.totalorder %s32, %s33
      %p44 = scmp.eq.s32.totalorder %s24, 0
      %p45 = por %p43, %p44
      %p46 = scmp.ne.s32.totalorder %s32, %s33
      %p47 = scmp.eq.s32.totalorder %s25, 1
      %p48 = por %p46, %p47
      %p50 = scmp.ne.s32.totalorder %s33, %s49
      %p51 = scmp.eq.s32.totalorder %s25, 0
      %p52 = por %p50, %p51
      %s54 = sadd.s32 %s53, 1
      %p57 = scmp.eq.s32.totalorder %s19, 1
      %p58 = scmp.ne.s32.totalorder %s53, %s55
      %p59 = scmp.eq.s32.totalorder %s19, 0
      %p60 = por %p58, %p59
      %p61 = scmp.ne.s32.totalorder %s53, %s55
      %p62 = scmp.eq.s32.totalorder %s24, 1
      %p63 = por %p61, %p62
      %p64 = scmp.ne.s32.totalorder %s55, %s56
      %p65 = scmp.eq.s32.totalorder %s24, 0
      %p66 = por %p64, %p65
      %p67 = scmp.ne.s32.totalorder %s55, %s56
      %p68 = scmp.eq.s32.totalorder %s25, 1
      %p69 = por %p67, %p68
      %p71 = scmp.ne.s32.totalorder %s56, %s70
      %p72 = scmp.eq.s32.totalorder %s25, 0
      %p73 = por %p71, %p72
      %s74 = ssub.s32 %s19, %s26
      %p75 = scmp.eq.s32.totalorder %s74, 0
      %s77 = sadd.s32 %s76, 1
      %s78 = scalar_select %p75, %s76, %s77
      %p81 = pneg %p75
      %p82 = scmp.eq.s32.totalorder %s19, 1
      %p83 = por %p81, %p82
      %p84 = scmp.ne.s32.totalorder %s76, %s79
      %p85 = scmp.eq.s32.totalorder %s19, 0
      %p86 = por %p84, %p85
      %p87 = scmp.ne.s32.totalorder %s76, %s79
      %p88 = scmp.eq.s32.totalorder %s24, 1
      %p89 = por %p87, %p88
      %p90 = scmp.ne.s32.totalorder %s79, %s80
      %p91 = scmp.eq.s32.totalorder %s24, 0
      %p92 = por %p90, %p91
      %p93 = scmp.ne.s32.totalorder %s79, %s80
      %p94 = scmp.eq.s32.totalorder %s25, 1
      %p95 = por %p93, %p94
      %p97 = scmp.ne.s32.totalorder %s80, %s96
      %p98 = scmp.eq.s32.totalorder %s25, 0
      %p99 = por %p97, %p98
      %s101 = sadd.s32 %s100, 1
      %p104 = scmp.eq.s32.totalorder %s19, 1
      %p105 = scmp.ne.s32.totalorder %s100, %s102
      %p106 = scmp.eq.s32.totalorder %s19, 0
      %p107 = por %p105, %p106
      %p108 = scmp.ne.s32.totalorder %s100, %s102
      %p109 = scmp.eq.s32.totalorder %s24, 1
      %p110 = por %p108, %p109
      %p111 = scmp.ne.s32.totalorder %s102, %s103
      %p112 = scmp.eq.s32.totalorder %s24, 0
      %p113 = por %p111, %p112
      %p114 = scmp.ne.s32.totalorder %s102, %s103
      %p115 = scmp.eq.s32.totalorder %s25, 1
      %p116 = por %p114, %p115
      %p118 = scmp.ne.s32.totalorder %s103, %s117
      %p119 = scmp.eq.s32.totalorder %s25, 0
      %p120 = por %p118, %p119
      %s121 = ssub.s32 %s19, %s26
      %p122 = scmp.eq.s32.totalorder %s121, 0
      %s124 = sadd.s32 %s123, 1
      %s125 = scalar_select %p122, %s123, %s124
      %p128 = pneg %p122
      %p129 = scmp.eq.s32.totalorder %s19, 1
      %p130 = por %p128, %p129
      %p131 = scmp.ne.s32.totalorder %s123, %s126
      %p132 = scmp.eq.s32.totalorder %s19, 0
      %p133 = por %p131, %p132
      %p134 = scmp.ne.s32.totalorder %s123, %s126
      %p135 = scmp.eq.s32.totalorder %s24, 1
      %p136 = por %p134, %p135
      %p137 = scmp.ne.s32.totalorder %s126, %s127
      %p138 = scmp.eq.s32.totalorder %s24, 0
      %p139 = por %p137, %p138
      %p140 = scmp.ne.s32.totalorder %s126, %s127
      %p141 = scmp.eq.s32.totalorder %s25, 1
      %p142 = por %p140, %p141
      %p144 = scmp.ne.s32.totalorder %s127, %s143
      %p145 = scmp.eq.s32.totalorder %s25, 0
      %p146 = por %p144, %p145
      %s148 = sadd.s32 %s147, 1
      %p151 = scmp.eq.s32.totalorder %s19, 1
      %p152 = scmp.ne.s32.totalorder %s147, %s149
      %p153 = scmp.eq.s32.totalorder %s19, 0
      %p154 = por %p152, %p153
      %p155 = scmp.ne.s32.totalorder %s147, %s149
      %p156 = scmp.eq.s32.totalorder %s24, 1
      %p157 = por %p155, %p156
      %p158 = scmp.ne.s32.totalorder %s149, %s150
      %p159 = scmp.eq.s32.totalorder %s24, 0
      %p160 = por %p158, %p159
      %p161 = scmp.ne.s32.totalorder %s149, %s150
      %p162 = scmp.eq.s32.totalorder %s25, 1
      %p163 = por %p161, %p162
      %p165 = scmp.ne.s32.totalorder %s150, %s164
      %p166 = scmp.eq.s32.totalorder %s25, 0
      %p167 = por %p165, %p166
      %s169 = sadd.s32 %s168, 1
      %p172 = scmp.eq.s32.totalorder %s19, 1
      %p173 = scmp.ne.s32.totalorder %s168, %s170
      %p174 = scmp.eq.s32.totalorder %s19, 0
      %p175 = por %p173, %p174
      %p176 = scmp.ne.s32.totalorder %s168, %s170
      %p177 = scmp.eq.s32.totalorder %s24, 1
      %p178 = por %p176, %p177
      %p179 = scmp.ne.s32.totalorder %s170, %s171
      %p180 = scmp.eq.s32.totalorder %s24, 0
      %p181 = por %p179, %p180
      %p182 = scmp.ne.s32.totalorder %s170, %s171
      %p183 = scmp.eq.s32.totalorder %s25, 1
      %p184 = por %p182, %p183
      %p186 = scmp.ne.s32.totalorder %s171, %s185
      %p187 = scmp.eq.s32.totalorder %s25, 0
      %p188 = por %p186, %p187
      %s190 = sadd.s32 %s189, 1
      %p193 = scmp.eq.s32.totalorder %s19, 1
      %p194 = scmp.ne.s32.totalorder %s189, %s191
      %p195 = scmp.eq.s32.totalorder %s19, 0
      %p196 = por %p194, %p195
      %p197 = scmp.ne.s32.totalorder %s189, %s191
      %p198 = scmp.eq.s32.totalorder %s24, 1
      %p199 = por %p197, %p198
      %p200 = scmp.ne.s32.totalorder %s191, %s192
      %p201 = scmp.eq.s32.totalorder %s24, 0
      %p202 = por %p200, %p201
      %p203 = scmp.ne.s32.totalorder %s191, %s192
      %p204 = scmp.eq.s32.totalorder %s25, 1
      %p205 = por %p203, %p204
      %p207 = scmp.ne.s32.totalorder %s192, %s206
      %p208 = scmp.eq.s32.totalorder %s25, 0
      %p209 = por %p207, %p208
      %s210 = ssub.s32 %s19, %s26
      %p211 = scmp.eq.s32.totalorder %s210, 0
      %s213 = sadd.s32 %s212, 1
      %s214 = scalar_select %p211, %s212, %s213
      %p217 = pneg %p211
      %p218 = scmp.eq.s32.totalorder %s19, 1
      %p219 = por %p217, %p218
      %p220 = scmp.ne.s32.totalorder %s212, %s215
      %p221 = scmp.eq.s32.totalorder %s19, 0
      %p222 = por %p220, %p221
      %p223 = scmp.ne.s32.totalorder %s212, %s215
      %p224 = scmp.eq.s32.totalorder %s24, 1
      %p225 = por %p223, %p224
      %p226 = scmp.ne.s32.totalorder %s215, %s216
      %p227 = scmp.eq.s32.totalorder %s24, 0
      %p228 = por %p226, %p227
      %p229 = scmp.ne.s32.totalorder %s215, %s216
      %p230 = scmp.eq.s32.totalorder %s25, 1
      %p231 = por %p229, %p230
      %p233 = scmp.ne.s32.totalorder %s216, %s232
      %p234 = scmp.eq.s32.totalorder %s25, 0
      %p235 = por %p233, %p234
      %s236 = ssub.s32 %s19, %s26
      %p237 = scmp.eq.s32.totalorder %s236, 0
      %s239 = sadd.s32 %s238, 1
      %s240 = scalar_select %p237, %s238, %s239
      %p243 = pneg %p237
      %p244 = scmp.eq.s32.totalorder %s19, 1
      %p245 = por %p243, %p244
      %p246 = scmp.ne.s32.totalorder %s238, %s241
      %p247 = scmp.eq.s32.totalorder %s19, 0
      %p248 = por %p246, %p247
      %p249 = scmp.ne.s32.totalorder %s238, %s241
      %p250 = scmp.eq.s32.totalorder %s24, 1
      %p251 = por %p249, %p250
      %p252 = scmp.ne.s32.totalorder %s241, %s242
      %p253 = scmp.eq.s32.totalorder %s24, 0
      %p254 = por %p252, %p253
      %p255 = scmp.ne.s32.totalorder %s241, %s242
      %p256 = scmp.eq.s32.totalorder %s25, 1
      %p257 = por %p255, %p256
      %p259 = scmp.ne.s32.totalorder %s242, %s258
      %p260 = scmp.eq.s32.totalorder %s25, 0
      %p261 = por %p259, %p260
      %p262 = scmp.le.s32.totalorder 1, %s19
      %p263 = scmp.lt.s32.totalorder %s19, 3
      %p264 = pnand %p262, %p263
      %p265 = pneg %p264
      // Predicated region
      $region9: #{r2gen_forward.1} parent=5 // pred_check
        _
      $region10: #{r2gen_forward.1} parent=5 // pred_check_branch
        %267 = sbr.rel (%p264) target = $region12
      $region11: #{r2gen_forward.1} parent=5 // pred_region
        %s268 = ssub.s32 %s19, 1
        // Predicated region
        $region13: #{r2gen_forward.1} parent=11 // pred_check
          %p269 = pneg %p66
        $region14: #{r2gen_forward.1} parent=11 // pred_check_branch
          %271 = sbr.rel (%p269) target = $region16
        $region15: #{r2gen_forward.1} parent=11 // pred_region
          _
        $region16: #{r2gen_forward.1} parent=11 // pred_fallthru
          _
        // Predicated region
        $region17: #{r2gen_forward.1} parent=11 // pred_check
          %p272 = pneg %p113
        $region18: #{r2gen_forward.1} parent=11 // pred_check_branch
          %274 = sbr.rel (%p272) target = $region20
        $region19: #{r2gen_forward.1} parent=11 // pred_region
          _
        $region20: #{r2gen_forward.1} parent=11 // pred_fallthru
          _
        // Predicated region
        $region21: #{r2gen_forward.1} parent=11 // pred_check
          %p275 = pneg %p160
        $region22: #{r2gen_forward.1} parent=11 // pred_check_branch
          %277 = sbr.rel (%p275) target = $region24
        $region23: #{r2gen_forward.1} parent=11 // pred_region
          _
        $region24: #{r2gen_forward.1} parent=11 // pred_fallthru
          _
        // Predicated region
        $region25: #{r2gen_forward.1} parent=11 // pred_check
          %p278 = pneg %p181
        $region26: #{r2gen_forward.1} parent=11 // pred_check_branch
          %280 = sbr.rel (%p278) target = $region28
        $region27: #{r2gen_forward.1} parent=11 // pred_region
          _
        $region28: #{r2gen_forward.1} parent=11 // pred_fallthru
          _
        // Predicated region
        $region29: #{r2gen_forward.1} parent=11 // pred_check
          %p281 = pneg %p202
        $region30: #{r2gen_forward.1} parent=11 // pred_check_branch
          %283 = sbr.rel (%p281) target = $region32
        $region31: #{r2gen_forward.1} parent=11 // pred_region
          _
        $region32: #{r2gen_forward.1} parent=11 // pred_fallthru
          _
      $region12: #{r2gen_forward.1} parent=5 // pred_fallthru
        _
      %p284 = scmp.lt.s32.totalorder %s19, 2
      // Predicated region
      $region33: #{r2gen_forward.1} parent=5 // pred_check
        %p285 = pneg %p284
      $region34: #{r2gen_forward.1} parent=5 // pred_check_branch
        %287 = sbr.rel (%p285) target = $region36
      $region35: #{r2gen_forward.1} parent=5 // pred_region
        // Predicated region
        $region37: #{r2gen_forward.1} parent=35 // pred_check
          %p288 = pneg %p39
        $region38: #{r2gen_forward.1} parent=35 // pred_check_branch
          %290 = sbr.rel (%p288) target = $region40
        $region39: #{r2gen_forward.1} parent=35 // pred_region
          %p291 = scmp.lt.s32.totalorder %s19, 1
          %s292 = scalar_select %p291, %s19, 1
          %s293 = smul.addr %s292, 2
          %s294 = smul.addr %s293, 2
          %s295 = scalar_lea.vmem %s0, %s294
        $region40: #{r2gen_forward.1} parent=35 // pred_fallthru
          _
        // Predicated region
        $region41: #{r2gen_forward.1} parent=35 // pred_check
          %p296 = pneg %p86
        $region42: #{r2gen_forward.1} parent=35 // pred_check_branch
          %298 = sbr.rel (%p296) target = $region44
        $region43: #{r2gen_forward.1} parent=35 // pred_region
          %p299 = scmp.lt.s32.totalorder %s19, 1
          %s300 = scalar_select %p299, %s19, 1
          %s301 = smul.addr %s300, 2
          %s302 = smul.addr %s301, 2
          %s303 = scalar_lea.vmem %s2, %s302
        $region44: #{r2gen_forward.1} parent=35 // pred_fallthru
          _
        // Predicated region
        $region45: #{r2gen_forward.1} parent=35 // pred_check
          %p304 = pneg %p133
        $region46: #{r2gen_forward.1} parent=35 // pred_check_branch
          %306 = sbr.rel (%p304) target = $region48
        $region47: #{r2gen_forward.1} parent=35 // pred_region
          %p307 = scmp.lt.s32.totalorder %s19, 1
          %s308 = scalar_select %p307, %s19, 1
          %s309 = smul.addr %s308, 4
          %s310 = scalar_lea.vmem %s4, %s309
        $region48: #{r2gen_forward.1} parent=35 // pred_fallthru
          _
      $region36: #{r2gen_forward.1} parent=5 // pred_fallthru
        _
      %p311 = scmp.le.s32.totalorder 1, %s19
      %p312 = scmp.lt.s32.totalorder %s19, 3
      %p313 = pnand %p311, %p312
      %p314 = pneg %p313
      // Predicated region
      $region49: #{r2gen_forward.1} parent=5 // pred_check
        _
      $region50: #{r2gen_forward.1} parent=5 // pred_check_branch
        %316 = sbr.rel (%p313) target = $region52
      $region51: #{r2gen_forward.1} parent=5 // pred_region
        %s317 = ssub.s32 %s19, 1
        %p318 = scmp.lt.s32.totalorder %s24, 1
        %s319 = scalar_select %p318, %s24, 1
        %s320 = smul.addr %s319, 2
        %s321 = smul.addr %s320, 2
        %s322 = scalar_lea.vmem %s0, %s321
        %p323 = pneg %p45
        %p324 = pneg %p42
        %p325 = pneg %p66
        %p326 = pneg %p63
        %p327 = scmp.lt.s32.totalorder %s24, 1
        %s328 = scalar_select %p327, %s24, 1
        %s329 = smul.addr %s328, 2
        %s330 = smul.addr %s329, 2
        %s331 = scalar_lea.vmem %s2, %s330
        %p332 = pneg %p92
        %p333 = pneg %p89
        %p334 = pneg %p113
        %p335 = pneg %p110
        %p336 = scmp.lt.s32.totalorder %s24, 1
        %s337 = scalar_select %p336, %s24, 1
        %s338 = smul.addr %s337, 4
        %s339 = scalar_lea.vmem %s4, %s338
        %p340 = pneg %p139
        %p341 = pneg %p136
        %p342 = pneg %p160
        %p343 = pneg %p157
        %p344 = pneg %p181
        %p345 = pneg %p178
        %p346 = pneg %p202
        %p347 = pneg %p199
        %p348 = pneg %p228
        %p349 = pneg %p225
        %p350 = scmp.lt.s32.totalorder %s24, 1
        %s351 = scalar_select %p350, %s24, 1
        %s352 = smul.addr %s351, 2
        %s353 = scalar_lea.vmem %s8, %s352
        %p354 = pneg %p254
        %p355 = pneg %p251
        %s356 = sand.u32 %s241, 1
        %s357 = scalar_lea.sflag [#allocation3], %s356
        %s358 = sand.u32 %s241, 1
        %s359 = smul.addr %s358, 16
        %s360 = scalar_lea.vmem [#allocation2], %s359
        %p361 = scmp.lt.s32.totalorder %s24, 1
        %s362 = scalar_select %p361, %s24, 1
        %s363 = smul.addr %s362, 2
        %s364 = smul.addr %s363, 2
        %s365 = scalar_lea.vmem %s0, %s364
        %p366 = scmp.lt.s32.totalorder %s24, 1
        %s367 = scalar_select %p366, %s24, 1
        %s368 = smul.addr %s367, 2
        %s369 = smul.addr %s368, 2
        %s370 = scalar_lea.vmem %s2, %s369
        %p371 = scmp.lt.s32.totalorder %s24, 1
        %s372 = scalar_select %p371, %s24, 1
        %s373 = smul.addr %s372, 4
        %s374 = scalar_lea.vmem %s4, %s373
        %p375 = scmp.lt.s32.totalorder %s24, 1
        %s376 = scalar_select %p375, %s24, 1
        %s377 = smul.addr %s376, 2
        %s378 = scalar_lea.vmem %s8, %s377
        %v380 = vld [vmem:[%s365] sm:$0xf]
        %v381 = vunpack.c.l.bf16 %v380
        %v383 = vcombine.high %v381, %v381
        %vm385 = vcmask 1043456
        %v386 = vsel %vm385, %v381, 0.0
        %v387 = vsel %vm385, %v383, 0.0
        %v388 = vadd.f32 %v386, %v387
        %389 = vadd.xlane.f32.xlu0 %v388
        %v390 = vpop.xlane.xlu0 %389
        %v391 = vrcp.pop 256.0
        %v392 = vmul.f32 %v390, %v391
        %v393 = vld [vmem:[%s1] sm:$0x3]
        %v394 = vunpack.c.l.bf16 %v393
        %v395 = vmul.f32 %v392, %v394
        %v396 = vsel %vm385, %v395, 0.0
        %v397 = vrot.slane %v396, 4
        %v398 = vadd.f32 %v396, %v397
        %v399 = vrot.slane %v398, 2
        %v400 = vadd.f32 %v398, %v399
        %v401 = vrot.slane %v400, 1
        %v402 = vadd.f32 %v400, %v401
        %v403 = vld [vmem:[%s370] sm:$0xf]
        %v404 = vunpack.c.l.bf16 %v403
        %v406 = vcombine.high %v404, %v404
        %v408 = vsel %vm385, %v404, 0.0
        %v409 = vrot.slane %v408, 4
        %v410 = vadd.f32 %v408, %v409
        %v411 = vrot.slane %v410, 2
        %v412 = vadd.f32 %v410, %v411
        %v413 = vrot.slane %v412, 1
        %v414 = vadd.f32 %v412, %v413
        %v415 = vsel %vm385, %v406, 0.0
        %v416 = vrot.slane %v415, 4
        %v417 = vadd.f32 %v415, %v416
        %v418 = vrot.slane %v417, 2
        %v419 = vadd.f32 %v417, %v418
        %v420 = vrot.slane %v419, 1
        %v421 = vadd.f32 %v419, %v420
        %v422 = vrcp.pop 4.0
        %v423 = vmul.f32 %v414, %v422
        %v424 = vmul.f32 %v421, %v422
        %v425 = vpack.c.bf16 %v423, %v423
        %v426 = vpack.c.bf16 %v424, %v424
        %v427 = vld [vmem:[%s3] sm:$0xf]
        %v428 = vld [vmem:[%s3 + $0x4] sm:$0xf]
        %v429 = vld [vmem:[%s3 + $0x8] sm:$0xf]
        %v430 = vld [vmem:[%s3 + $0xc] sm:$0xf]
        %v431 = vld [vmem:[%s3 + $0x10] sm:$0xf]
        %v432 = vld [vmem:[%s3 + $0x14] sm:$0xf]
        %v433 = vld [vmem:[%s3 + $0x18] sm:$0xf]
        %v434 = vld [vmem:[%s3 + $0x1c] sm:$0xf]
        %v435 = vld [vmem:[%s3 + $0x20] sm:$0xf]
        %v436 = vld [vmem:[%s3 + $0x24] sm:$0xf]
        %v437 = vld [vmem:[%s3 + $0x28] sm:$0xf]
        %v438 = vld [vmem:[%s3 + $0x2c] sm:$0xf]
        %v439 = vld [vmem:[%s3 + $0x30] sm:$0xf]
        %v440 = vld [vmem:[%s3 + $0x34] sm:$0xf]
        %v441 = vld [vmem:[%s3 + $0x38] sm:$0xf]
        %v442 = vld [vmem:[%s3 + $0x3c] sm:$0xf]
        %v443 = vld [vmem:[%s3 + $0x40] sm:$0xf]
        %v444 = vld [vmem:[%s3 + $0x44] sm:$0xf]
        %v445 = vld [vmem:[%s3 + $0x48] sm:$0xf]
        %v446 = vld [vmem:[%s3 + $0x4c] sm:$0xf]
        %v447 = vld [vmem:[%s3 + $0x50] sm:$0xf]
        %v448 = vld [vmem:[%s3 + $0x54] sm:$0xf]
        %v449 = vld [vmem:[%s3 + $0x58] sm:$0xf]
        %v450 = vld [vmem:[%s3 + $0x5c] sm:$0xf]
        %v451 = vld [vmem:[%s3 + $0x60] sm:$0xf]
        %v452 = vld [vmem:[%s3 + $0x64] sm:$0xf]
        %v453 = vld [vmem:[%s3 + $0x68] sm:$0xf]
        %v454 = vld [vmem:[%s3 + $0x6c] sm:$0xf]
        %v455 = vld [vmem:[%s3 + $0x70] sm:$0xf]
        %v456 = vld [vmem:[%s3 + $0x74] sm:$0xf]
        %v457 = vld [vmem:[%s3 + $0x78] sm:$0xf]
        %v458 = vld [vmem:[%s3 + $0x7c] sm:$0xf]
        %v491 = vunpack.c.l.b16 %v427
        %v492 = vunpack.c.l.b16 %v428
        %v493 = vunpack.c.l.b16 %v429
        %v494 = vunpack.c.l.b16 %v430
        %v495 = vunpack.c.l.b16 %v431
        %v496 = vunpack.c.l.b16 %v432
        %v497 = vunpack.c.l.b16 %v433
        %v498 = vunpack.c.l.b16 %v434
        %v499 = vunpack.c.l.b16 %v435
        %v500 = vunpack.c.l.b16 %v436
        %v501 = vunpack.c.l.b16 %v437
        %v502 = vunpack.c.l.b16 %v438
        %v503 = vunpack.c.l.b16 %v439
        %v504 = vunpack.c.l.b16 %v440
        %v505 = vunpack.c.l.b16 %v441
        %v506 = vunpack.c.l.b16 %v442
        %v507 = vunpack.c.l.b16 %v443
        %v508 = vunpack.c.l.b16 %v444
        %v509 = vunpack.c.l.b16 %v445
        %v510 = vunpack.c.l.b16 %v446
        %v511 = vunpack.c.l.b16 %v447
        %v512 = vunpack.c.l.b16 %v448
        %v513 = vunpack.c.l.b16 %v449
        %v514 = vunpack.c.l.b16 %v450
        %v515 = vunpack.c.l.b16 %v451
        %v516 = vunpack.c.l.b16 %v452
        %v517 = vunpack.c.l.b16 %v453
        %v518 = vunpack.c.l.b16 %v454
        %v519 = vunpack.c.l.b16 %v455
        %v520 = vunpack.c.l.b16 %v456
        %v521 = vunpack.c.l.b16 %v457
        %v522 = vunpack.c.l.b16 %v458
        %v523 = vpack.c.b16 %v492, %v491
        %v524 = vpack.c.b16 %v494, %v493
        %v525 = vpack.c.b16 %v496, %v495
        %v526 = vpack.c.b16 %v498, %v497
        %v527 = vpack.c.b16 %v500, %v499
        %v528 = vpack.c.b16 %v502, %v501
        %v529 = vpack.c.b16 %v504, %v503
        %v530 = vpack.c.b16 %v506, %v505
        %v531 = vpack.c.b16 %v508, %v507
        %v532 = vpack.c.b16 %v510, %v509
        %v533 = vpack.c.b16 %v512, %v511
        %v534 = vpack.c.b16 %v514, %v513
        %v535 = vpack.c.b16 %v516, %v515
        %v536 = vpack.c.b16 %v518, %v517
        %v537 = vpack.c.b16 %v520, %v519
        %v538 = vpack.c.b16 %v522, %v521
        %555 = vmatprep.subr.bf16.mxu0 0
        %556 = vmatpush1.bf16.msra.mxu0 %v530
        %557 = vmatprep.subr.bf16.mxu0 0
        %558 = vmatpush1.bf16.msra.mxu0 %v529
        %559 = vmatprep.subr.bf16.mxu0 0
        %560 = vmatpush1.bf16.msra.mxu0 %v528
        %561 = vmatprep.subr.bf16.mxu0 0
        %562 = vmatpush1.bf16.msra.mxu0 %v527
        %563 = vmatprep.subr.bf16.mxu0 0
        %564 = vmatpush1.bf16.msra.mxu0 %v526
        %565 = vmatprep.subr.bf16.mxu0 0
        %566 = vmatpush1.bf16.msra.mxu0 %v525
        %567 = vmatprep.subr.bf16.mxu0 0
        %568 = vmatpush1.bf16.msra.mxu0 %v524
        %569 = vmatprep.subr.bf16.mxu0 0
        %570 = vmatpush1.bf16.msra.mxu0 %v523
        %571 = vmatprep.subr.bf16.mxu0 0
        %572 = vmatpush2.bf16.msra.mxu0 %v538
        %573 = vmatprep.subr.bf16.mxu0 0
        %574 = vmatpush2.bf16.msra.mxu0 %v537
        %575 = vmatprep.subr.bf16.mxu0 0
        %576 = vmatpush2.bf16.msra.mxu0 %v536
        %577 = vmatprep.subr.bf16.mxu0 0
        %578 = vmatpush2.bf16.msra.mxu0 %v535
        %579 = vmatprep.subr.bf16.mxu0 0
        %580 = vmatpush2.bf16.msra.mxu0 %v534
        %581 = vmatprep.subr.bf16.mxu0 0
        %582 = vmatpush2.bf16.msra.mxu0 %v533
        %583 = vmatprep.subr.bf16.mxu0 0
        %584 = vmatpush2.bf16.msra.mxu0 %v532
        %585 = vmatprep.subr.bf16.mxu0 0
        %586 = vmatpush2.bf16.msra.mxu0 %v531
        %587 = vmatprep.mubr.bf16.mxu0 %v426
        %588 = vmatmul.mubr.bf16.gmra.mxu0 %v425
        %v589 = vpop.f32.mrf.mxu0
        %v590 = vadd.f32 %v402, %v589
        %v591 = vpop.f32.mrf.mxu0
        %v592 = vpop.f32.mrf.mxu0
        %v593 = vpop.f32.mrf.mxu0
        %594 = vdwg.mxu0
        %v595 = vld [vmem:[%s374] sm:$0xf]
        %v596 = vunpack.c.l.bf16 %v595
        %v597 = vrot.slane %v596, 4
        %v598 = vadd.f32 %v596, %v597
        %v599 = vrot.slane %v598, 2
        %v600 = vadd.f32 %v598, %v599
        %v601 = vrot.slane %v600, 1
        %v602 = vadd.f32 %v600, %v601
        %v603 = vrcp.pop 8.0
        %v604 = vmul.f32 %v602, %v603
        %v605 = vld [vmem:[%s5] sm:$0xff]
        %v606 = vld [vmem:[%s5 + $0x8] sm:$0xff]
        %v607 = vld [vmem:[%s5 + $0x10] sm:$0xff]
        %v608 = vld [vmem:[%s5 + $0x18] sm:$0xff]
        %v609 = vld [vmem:[%s5 + $0x20] sm:$0xff]
        %v610 = vld [vmem:[%s5 + $0x28] sm:$0xff]
        %v611 = vld [vmem:[%s5 + $0x30] sm:$0xff]
        %v612 = vld [vmem:[%s5 + $0x38] sm:$0xff]
        %v613 = vld [vmem:[%s5 + $0x40] sm:$0xff]
        %v614 = vld [vmem:[%s5 + $0x48] sm:$0xff]
        %v615 = vld [vmem:[%s5 + $0x50] sm:$0xff]
        %v616 = vld [vmem:[%s5 + $0x58] sm:$0xff]
        %v617 = vld [vmem:[%s5 + $0x60] sm:$0xff]
        %v618 = vld [vmem:[%s5 + $0x68] sm:$0xff]
        %v619 = vld [vmem:[%s5 + $0x70] sm:$0xff]
        %v620 = vld [vmem:[%s5 + $0x78] sm:$0xff]
        %v637 = vunpack.c.l.b16 %v605
        %v638 = vunpack.c.h.b16 %v605
        %v639 = vunpack.c.l.b16 %v606
        %v640 = vunpack.c.h.b16 %v606
        %v641 = vunpack.c.l.b16 %v607
        %v642 = vunpack.c.h.b16 %v607
        %v643 = vunpack.c.l.b16 %v608
        %v644 = vunpack.c.h.b16 %v608
        %v645 = vunpack.c.l.b16 %v609
        %v646 = vunpack.c.h.b16 %v609
        %v647 = vunpack.c.l.b16 %v610
        %v648 = vunpack.c.h.b16 %v610
        %v649 = vunpack.c.l.b16 %v611
        %v650 = vunpack.c.h.b16 %v611
        %v651 = vunpack.c.l.b16 %v612
        %v652 = vunpack.c.h.b16 %v612
        %v653 = vunpack.c.l.b16 %v613
        %v654 = vunpack.c.h.b16 %v613
        %v655 = vunpack.c.l.b16 %v614
        %v656 = vunpack.c.h.b16 %v614
        %v657 = vunpack.c.l.b16 %v615
        %v658 = vunpack.c.h.b16 %v615
        %v659 = vunpack.c.l.b16 %v616
        %v660 = vunpack.c.h.b16 %v616
        %v661 = vunpack.c.l.b16 %v617
        %v662 = vunpack.c.h.b16 %v617
        %v663 = vunpack.c.l.b16 %v618
        %v664 = vunpack.c.h.b16 %v618
        %v665 = vunpack.c.l.b16 %v619
        %v666 = vunpack.c.h.b16 %v619
        %v667 = vunpack.c.l.b16 %v620
        %v668 = vunpack.c.h.b16 %v620
        %v669 = vpack.c.b16 %v639, %v637
        %v670 = vpack.c.b16 %v640, %v638
        %v671 = vpack.c.b16 %v643, %v641
        %v672 = vpack.c.b16 %v644, %v642
        %v673 = vpack.c.b16 %v647, %v645
        %v674 = vpack.c.b16 %v648, %v646
        %v675 = vpack.c.b16 %v651, %v649
        %v676 = vpack.c.b16 %v652, %v650
        %v677 = vpack.c.b16 %v655, %v653
        %v678 = vpack.c.b16 %v656, %v654
        %v679 = vpack.c.b16 %v659, %v657
        %v680 = vpack.c.b16 %v660, %v658
        %v681 = vpack.c.b16 %v663, %v661
        %v682 = vpack.c.b16 %v664, %v662
        %v683 = vpack.c.b16 %v667, %v665
        %v684 = vpack.c.b16 %v668, %v666
        %701 = vmatprep.subr.bf16.mxu0 %v684
        %702 = vmatpush1.bf16.msra.mxu0 %v683
        %703 = vmatprep.subr.bf16.mxu0 %v682
        %704 = vmatpush1.bf16.msra.mxu0 %v681
        %705 = vmatprep.subr.bf16.mxu0 %v680
        %706 = vmatpush1.bf16.msra.mxu0 %v679
        %707 = vmatprep.subr.bf16.mxu0 %v678
        %708 = vmatpush1.bf16.msra.mxu0 %v677
        %709 = vmatprep.subr.bf16.mxu0 %v676
        %710 = vmatpush1.bf16.msra.mxu0 %v675
        %711 = vmatprep.subr.bf16.mxu0 %v674
        %712 = vmatpush1.bf16.msra.mxu0 %v673
        %713 = vmatprep.subr.bf16.mxu0 %v672
        %714 = vmatpush1.bf16.msra.mxu0 %v671
        %715 = vmatprep.subr.bf16.mxu0 %v670
        %716 = vmatpush1.bf16.msra.mxu0 %v669
        %717 = vmatprep.subr.bf16.mxu0 0
        %718 = vmatpush2.bf16.msra.mxu0 0
        %719 = vmatprep.subr.bf16.mxu0 0
        %720 = vmatpush2.bf16.msra.mxu0 0
        %721 = vmatprep.subr.bf16.mxu0 0
        %722 = vmatpush2.bf16.msra.mxu0 0
        %723 = vmatprep.subr.bf16.mxu0 0
        %724 = vmatpush2.bf16.msra.mxu0 0
        %725 = vmatprep.subr.bf16.mxu0 0
        %726 = vmatpush2.bf16.msra.mxu0 0
        %727 = vmatprep.subr.bf16.mxu0 0
        %728 = vmatpush2.bf16.msra.mxu0 0
        %729 = vmatprep.subr.bf16.mxu0 0
        %730 = vmatpush2.bf16.msra.mxu0 0
        %731 = vmatprep.subr.bf16.mxu0 0
        %732 = vmatpush2.bf16.msra.mxu0 0
        %733 = vmatprep.mubr.bf16.mxu0 0
        %734 = vmatmul.mubr.bf16.gmra.mxu0 %v595
        %v735 = vpop.f32.mrf.mxu0
        %v736 = vadd.f32 0.0, %v735
        %v737 = vpop.f32.mrf.mxu0
        %v738 = vadd.f32 0.0, %v737
        %v739 = vpop.f32.mrf.mxu0
        %v740 = vpop.f32.mrf.mxu0
        %741 = vdwg.mxu0
        %742 = vst [vmem:[%s360] sm:$0xff] %v736
        %743 = vst [vmem:[%s360 + $0x8] sm:$0xff] %v738
        %v744 = vld [vmem:[%s6] sm:$0xf]
        %v745 = vld [vmem:[%s6 + $0x4] sm:$0xf]
        %v746 = vld [vmem:[%s6 + $0x8] sm:$0xf]
        %v747 = vld [vmem:[%s6 + $0xc] sm:$0xf]
        %v748 = vld [vmem:[%s6 + $0x10] sm:$0xf]
        %v749 = vld [vmem:[%s6 + $0x14] sm:$0xf]
        %v750 = vld [vmem:[%s6 + $0x18] sm:$0xf]
        %v751 = vld [vmem:[%s6 + $0x1c] sm:$0xf]
        %v752 = vld [vmem:[%s6 + $0x20] sm:$0xf]
        %v753 = vld [vmem:[%s6 + $0x24] sm:$0xf]
        %v754 = vld [vmem:[%s6 + $0x28] sm:$0xf]
        %v755 = vld [vmem:[%s6 + $0x2c] sm:$0xf]
        %v756 = vld [vmem:[%s6 + $0x30] sm:$0xf]
        %v757 = vld [vmem:[%s6 + $0x34] sm:$0xf]
        %v758 = vld [vmem:[%s6 + $0x38] sm:$0xf]
        %v759 = vld [vmem:[%s6 + $0x3c] sm:$0xf]
        %v760 = vpack.c.bf16 %v604, %v604
        %v777 = vunpack.c.l.b16 %v744
        %v778 = vunpack.c.l.b16 %v745
        %v779 = vunpack.c.l.b16 %v746
        %v780 = vunpack.c.l.b16 %v747
        %v781 = vunpack.c.l.b16 %v748
        %v782 = vunpack.c.l.b16 %v749
        %v783 = vunpack.c.l.b16 %v750
        %v784 = vunpack.c.l.b16 %v751
        %v785 = vunpack.c.l.b16 %v752
        %v786 = vunpack.c.l.b16 %v753
        %v787 = vunpack.c.l.b16 %v754
        %v788 = vunpack.c.l.b16 %v755
        %v789 = vunpack.c.l.b16 %v756
        %v790 = vunpack.c.l.b16 %v757
        %v791 = vunpack.c.l.b16 %v758
        %v792 = vunpack.c.l.b16 %v759
        %v793 = vpack.c.b16 %v778, %v777
        %v794 = vpack.c.b16 %v780, %v779
        %v795 = vpack.c.b16 %v782, %v781
        %v796 = vpack.c.b16 %v784, %v783
        %v797 = vpack.c.b16 %v786, %v785
        %v798 = vpack.c.b16 %v788, %v787
        %v799 = vpack.c.b16 %v790, %v789
        %v800 = vpack.c.b16 %v792, %v791
        %809 = vmatprep.subr.bf16.mxu0 0
        %810 = vmatpush1.bf16.xpose.msra.mxu0 %v800
        %811 = vmatprep.subr.bf16.mxu0 0
        %812 = vmatpush1.bf16.xpose.msra.mxu0 %v799
        %813 = vmatprep.subr.bf16.mxu0 0
        %814 = vmatpush1.bf16.xpose.msra.mxu0 %v798
        %815 = vmatprep.subr.bf16.mxu0 0
        %816 = vmatpush1.bf16.xpose.msra.mxu0 %v797
        %817 = vmatprep.subr.bf16.mxu0 0
        %818 = vmatpush1.bf16.xpose.msra.mxu0 %v796
        %819 = vmatprep.subr.bf16.mxu0 0
        %820 = vmatpush1.bf16.xpose.msra.mxu0 %v795
        %821 = vmatprep.subr.bf16.mxu0 0
        %822 = vmatpush1.bf16.xpose.msra.mxu0 %v794
        %823 = vmatprep.subr.bf16.mxu0 0
        %824 = vmatpush1.bf16.xpose.msra.mxu0 %v793
        %825 = vmatprep.subr.bf16.mxu0 0
        %826 = vmatpush2.bf16.xpose.msra.mxu0 0
        %827 = vmatprep.subr.bf16.mxu0 0
        %828 = vmatpush2.bf16.xpose.msra.mxu0 0
        %829 = vmatprep.subr.bf16.mxu0 0
        %830 = vmatpush2.bf16.xpose.msra.mxu0 0
        %831 = vmatprep.subr.bf16.mxu0 0
        %832 = vmatpush2.bf16.xpose.msra.mxu0 0
        %833 = vmatprep.subr.bf16.mxu0 0
        %834 = vmatpush2.bf16.xpose.msra.mxu0 0
        %835 = vmatprep.subr.bf16.mxu0 0
        %836 = vmatpush2.bf16.xpose.msra.mxu0 0
        %837 = vmatprep.subr.bf16.mxu0 0
        %838 = vmatpush2.bf16.xpose.msra.mxu0 0
        %839 = vmatprep.subr.bf16.mxu0 0
        %840 = vmatpush2.bf16.xpose.msra.mxu0 0
        %841 = vmatprep.mubr.bf16.mxu0 0
        %842 = vmatmul.mubr.bf16.gmra.mxu0 %v760
        %v843 = vpop.f32.mrf.mxu0
        %v844 = vadd.f32 0.0, %v843
        %v845 = vpop.f32.mrf.mxu0
        %v846 = vpop.f32.mrf.mxu0
        %v847 = vpop.f32.mrf.mxu0
        %848 = vdwg.mxu0
        %v849 = vmul.f32 %v844, %v844
        %vm850 = vcmask 1040384
        %v851 = vsel %vm850, %v849, 0.0
        %852 = vadd.xlane.f32.xlu0 %v851
        %v853 = vpop.xlane.xlu0 %852
        %v854 = vmax.f32 %v853, 1e-24
        %v855 = vrsqrt.pop %v854
        %v856 = vmul.f32 %v844, %v855
        %v857 = vld [vmem:[%s7] sm:$0xf]
        %v858 = vld [vmem:[%s7 + $0x4] sm:$0xf]
        %v859 = vld [vmem:[%s7 + $0x8] sm:$0xf]
        %v860 = vld [vmem:[%s7 + $0xc] sm:$0xf]
        %v861 = vld [vmem:[%s7 + $0x10] sm:$0xf]
        %v862 = vld [vmem:[%s7 + $0x14] sm:$0xf]
        %v863 = vld [vmem:[%s7 + $0x18] sm:$0xf]
        %v864 = vld [vmem:[%s7 + $0x1c] sm:$0xf]
        %v865 = vld [vmem:[%s7 + $0x20] sm:$0xf]
        %v866 = vld [vmem:[%s7 + $0x24] sm:$0xf]
        %v867 = vld [vmem:[%s7 + $0x28] sm:$0xf]
        %v868 = vld [vmem:[%s7 + $0x2c] sm:$0xf]
        %v869 = vld [vmem:[%s7 + $0x30] sm:$0xf]
        %v870 = vld [vmem:[%s7 + $0x34] sm:$0xf]
        %v871 = vld [vmem:[%s7 + $0x38] sm:$0xf]
        %v872 = vld [vmem:[%s7 + $0x3c] sm:$0xf]
        %v873 = vpack.c.bf16 %v590, %v590
        %v890 = vunpack.c.l.b16 %v857
        %v891 = vunpack.c.l.b16 %v858
        %v892 = vunpack.c.l.b16 %v859
        %v893 = vunpack.c.l.b16 %v860
        %v894 = vunpack.c.l.b16 %v861
        %v895 = vunpack.c.l.b16 %v862
        %v896 = vunpack.c.l.b16 %v863
        %v897 = vunpack.c.l.b16 %v864
        %v898 = vunpack.c.l.b16 %v865
        %v899 = vunpack.c.l.b16 %v866
        %v900 = vunpack.c.l.b16 %v867
        %v901 = vunpack.c.l.b16 %v868
        %v902 = vunpack.c.l.b16 %v869
        %v903 = vunpack.c.l.b16 %v870
        %v904 = vunpack.c.l.b16 %v871
        %v905 = vunpack.c.l.b16 %v872
        %v906 = vpack.c.b16 %v891, %v890
        %v907 = vpack.c.b16 %v893, %v892
        %v908 = vpack.c.b16 %v895, %v894
        %v909 = vpack.c.b16 %v897, %v896
        %v910 = vpack.c.b16 %v899, %v898
        %v911 = vpack.c.b16 %v901, %v900
        %v912 = vpack.c.b16 %v903, %v902
        %v913 = vpack.c.b16 %v905, %v904
        %922 = vmatprep.subr.bf16.mxu0 0
        %923 = vmatpush1.bf16.xpose.msra.mxu0 %v913
        %924 = vmatprep.subr.bf16.mxu0 0
        %925 = vmatpush1.bf16.xpose.msra.mxu0 %v912
        %926 = vmatprep.subr.bf16.mxu0 0
        %927 = vmatpush1.bf16.xpose.msra.mxu0 %v911
        %928 = vmatprep.subr.bf16.mxu0 0
        %929 = vmatpush1.bf16.xpose.msra.mxu0 %v910
        %930 = vmatprep.subr.bf16.mxu0 0
        %931 = vmatpush1.bf16.xpose.msra.mxu0 %v909
        %932 = vmatprep.subr.bf16.mxu0 0
        %933 = vmatpush1.bf16.xpose.msra.mxu0 %v908
        %934 = vmatprep.subr.bf16.mxu0 0
        %935 = vmatpush1.bf16.xpose.msra.mxu0 %v907
        %936 = vmatprep.subr.bf16.mxu0 0
        %937 = vmatpush1.bf16.xpose.msra.mxu0 %v906
        %938 = vmatprep.subr.bf16.mxu0 0
        %939 = vmatpush2.bf16.xpose.msra.mxu0 0
        %940 = vmatprep.subr.bf16.mxu0 0
        %941 = vmatpush2.bf16.xpose.msra.mxu0 0
        %942 = vmatprep.subr.bf16.mxu0 0
        %943 = vmatpush2.bf16.xpose.msra.mxu0 0
        %944 = vmatprep.subr.bf16.mxu0 0
        %945 = vmatpush2.bf16.xpose.msra.mxu0 0
        %946 = vmatprep.subr.bf16.mxu0 0
        %947 = vmatpush2.bf16.xpose.msra.mxu0 0
        %948 = vmatprep.subr.bf16.mxu0 0
        %949 = vmatpush2.bf16.xpose.msra.mxu0 0
        %950 = vmatprep.subr.bf16.mxu0 0
        %951 = vmatpush2.bf16.xpose.msra.mxu0 0
        %952 = vmatprep.subr.bf16.mxu0 0
        %953 = vmatpush2.bf16.xpose.msra.mxu0 0
        %954 = vmatprep.mubr.bf16.mxu0 0
        %955 = vmatmul.mubr.bf16.gmra.mxu0 %v873
        %v956 = vpop.f32.mrf.mxu0
        %v957 = vadd.f32 0.0, %v956
        %v958 = vpop.f32.mrf.mxu0
        %v959 = vpop.f32.mrf.mxu0
        %v960 = vpop.f32.mrf.mxu0
        %961 = vdwg.mxu0
        %v962 = vmul.f32 %v957, %v957
        %v963 = vsel %vm850, %v962, 0.0
        %964 = vadd.xlane.f32.xlu0 %v963
        %v965 = vpop.xlane.xlu0 %964
        %v966 = vmax.f32 %v965, 1e-24
        %v967 = vrsqrt.pop %v966
        %v968 = vmul.f32 %v957, %v967
        %v971 = vcombine.low %v856, %v968
        %v973 = vunpack.c.l.s4 1966171168
        %v974 = vunpack.c.0.s8 %v973
        %v975 = vlaneseq
        %v976 = vshrl.u32 %v975, 7
        %v977 = vsub.s32 %v974, %v976
        %v978 = vrot.slane %v971, %v977
        %v980 = vunpack.c.l.s4 1966171168
        %v981 = vunpack.c.0.s8 %v980
        %v982 = vlaneseq
        %v983 = vshrl.u32 %v982, 7
        %v984 = vsub.s32 %v981, %v983
        %v985 = vrot.slane %v978, %v984
        %v987 = vlaneseq
        %vm988 = vcmp.ge.s32.totalorder %v987, 0
        %vm989 = vcmp.lt.s32.totalorder %v987, 256
        %vm990 = vmand %vm988, %vm989
        %991 = vst.msk [vmem:[%s378] sm:$0x3] %vm990, %v985
        %p992 = scmp.lt.s32.totalorder %s24, 1
        %s993 = scalar_select %p992, %s24, 1
        %s994 = smul.addr %s993, 2
        %s995 = scalar_lea.vmem %s8, %s994
        %s996 = sand.u32 %s241, 1
        %s997 = scalar_lea.sflag [#allocation3], %s996
        %s998 = sand.u32 %s241, 1
        %s999 = smul.addr %s998, 16
        %s1000 = scalar_lea.vmem [#allocation2], %s999
        // Predicated region
        $region53: #{r2gen_forward.1} parent=51 // pred_check
          %p1001 = pneg %p225
        $region54: #{r2gen_forward.1} parent=51 // pred_check_branch
          %1003 = sbr.rel (%p1001) target = $region56
        $region55: #{r2gen_forward.1} parent=51 // pred_region
          _
        $region56: #{r2gen_forward.1} parent=51 // pred_fallthru
          _
        // Predicated region
        $region57: #{r2gen_forward.1} parent=51 // pred_check
          %p1004 = pneg %p251
        $region58: #{r2gen_forward.1} parent=51 // pred_check_branch
          %1006 = sbr.rel (%p1004) target = $region60
        $region59: #{r2gen_forward.1} parent=51 // pred_region
          %s1008 = ssub.s32 256, 256
          %1009 = vsyncadd %s997, %s1008
          %s1010 = smul.addr %s24, 2
          %s1011 = smul.addr %s1010, 128
          %s1012 = scalar_lea.hbm %s9, %s1011
          %s1014 = sshll.u32 %s1000, 4
          %s1015 = int_to_ptr.vmem [resolvable:$true] %s1014
          %1017 = dma.vmem_to_hbm [thread:$0]  %s1015, 256, %s1012, %s997
        $region60: #{r2gen_forward.1} parent=51 // pred_fallthru
          _
      $region52: #{r2gen_forward.1} parent=5 // pred_fallthru
        _
      %p1018 = scmp.le.s32.totalorder 2, %s19
      // Predicated region
      $region61: #{r2gen_forward.1} parent=5 // pred_check
        %p1019 = pneg %p1018
      $region62: #{r2gen_forward.1} parent=5 // pred_check_branch
        %1021 = sbr.rel (%p1019) target = $region64
      $region63: #{r2gen_forward.1} parent=5 // pred_region
        %s1022 = ssub.s32 %s19, 2
        // Predicated region
        $region65: #{r2gen_forward.1} parent=63 // pred_check
          %p1023 = pneg %p231
        $region66: #{r2gen_forward.1} parent=63 // pred_check_branch
          %1025 = sbr.rel (%p1023) target = $region68
        $region67: #{r2gen_forward.1} parent=63 // pred_region
          %p1026 = scmp.lt.s32.totalorder %s25, 1
          %s1027 = scalar_select %p1026, %s25, 1
          %s1028 = smul.addr %s1027, 2
          %s1029 = scalar_lea.vmem %s8, %s1028
        $region68: #{r2gen_forward.1} parent=63 // pred_fallthru
          _
        // Predicated region
        $region69: #{r2gen_forward.1} parent=63 // pred_check
          %p1030 = pneg %p257
        $region70: #{r2gen_forward.1} parent=63 // pred_check_branch
          %1032 = sbr.rel (%p1030) target = $region72
        $region71: #{r2gen_forward.1} parent=63 // pred_region
          %s1033 = sand.u32 %s242, 1
          %s1034 = scalar_lea.sflag [#allocation3], %s1033
          %s1035 = sand.u32 %s242, 1
          %s1036 = smul.addr %s1035, 16
          %s1037 = scalar_lea.vmem [#allocation2], %s1036
          %1038 = dma.done %s1034, 256
        $region72: #{r2gen_forward.1} parent=63 // pred_fallthru
          _
      $region64: #{r2gen_forward.1} parent=5 // pred_fallthru
        _
    $region6: #{r2gen_forward.1} parent=1 // loop_footer
      %s23 = sadd.s32 1, %s19
    $region7: #{r2gen_forward.1} parent=1 // loop_footer_branch
      %18 = sbr.rel target = $region3
    $region8: #{r2gen_forward.1} parent=1 // loop_exit
      _
    %1039 = vsyncpa [#allocation3], 1
    %s1040 = scalar_lea.sflag [#allocation3], 1
    %1041 = vsyncpa %s1040, 1

</llo_original>
